<compile_context>
chip_gen: v7x
topology: tpu7x:2x2x1
jax: 0.10.0
libtpu: 0.0.40
codegen_flags: <defaults>
</compile_context>

<pallas_src>
import jax
import jax.numpy as jnp
from jax.experimental import pallas as pl
from jax.experimental.pallas import tpu as pltpu


def _flatcap_kernel(x_ref, o_ref):
    # x_ref: (bB, tS, tC), o_ref: (bB, tC, tS).  Swap the last two axes (XLU).
    o_ref[...] = jnp.transpose(x_ref[...], (0, 2, 1))


_SMALL_BYTES = 256 * 1024       # below this, use the single-step path
_MAX_TILE_BYTES = 1 << 20       # per-buffer VMEM budget for one tile


def _choose_tiles(S, C, itemsize):
    # Channel axis: keep whole when small (keeps each input tile one
    # contiguous HBM run); only tile when large.  512 is a multiple of 128,
    # so it is always a legal block edge.
    tC = 512 if C > 512 else C
    # Spatial axis = output lane axis: as large a multiple of 128 as the
    # per-buffer budget allows, capped at 1024 (measured sweet spot).
    budget_rows = max(128, _MAX_TILE_BYTES // max(1, tC * itemsize))
    tS = min(1024, (budget_rows // 128) * 128)
    if tS >= S:
        tS = S
    return tS, tC


def flat_cap(x):
    """x: (B, d, h, w, num_cap, num_atom) -> (B, num_cap*num_atom, d, h, w)."""
    assert x.ndim == 6, "The input is not a capsule."
    B, d, h, w, num_cap, num_atom = x.shape
    S = d * h * w
    C = num_cap * num_atom
    itemsize = jnp.dtype(x.dtype).itemsize

    # Pure view in default layout: (B, S, C), matching torch's
    # x.view(B, -1, num_cap*num_atom).
    x_flat = x.reshape(B, S, C)

    if B * S * C * itemsize <= _SMALL_BYTES:
        # Launch-bound size: a single grid step over the whole tensor removes
        # per-step pipelining overhead.
        out_flat = pl.pallas_call(
            _flatcap_kernel,
            out_shape=jax.ShapeDtypeStruct((B, C, S), x.dtype),
            grid_spec=pltpu.PrefetchScalarGridSpec(
                num_scalar_prefetch=0,
                grid=(1,),
                in_specs=[pl.BlockSpec((B, S, C), lambda i: (0, 0, 0))],
                out_specs=pl.BlockSpec((B, C, S), lambda i: (0, 0, 0)),
            ),
            compiler_params=pltpu.CompilerParams(
                dimension_semantics=("arbitrary",)),
        )(x_flat)
    else:
        tS, tC = _choose_tiles(S, C, itemsize)
        grid = (B, pl.cdiv(S, tS), pl.cdiv(C, tC))
        out_flat = pl.pallas_call(
            _flatcap_kernel,
            out_shape=jax.ShapeDtypeStruct((B, C, S), x.dtype),
            grid_spec=pltpu.PrefetchScalarGridSpec(
                num_scalar_prefetch=0,
                grid=grid,
                in_specs=[pl.BlockSpec((1, tS, tC), lambda b, s, c: (b, s, c))],
                out_specs=pl.BlockSpec((1, tC, tS), lambda b, s, c: (b, c, s)),
            ),
            compiler_params=pltpu.CompilerParams(
                dimension_semantics=("parallel", "parallel", "parallel")),
        )(x_flat)

    # Pure view: (B, C, d, h, w), matching torch's final .view(...).
    return out_flat.reshape(B, C, d, h, w)


def _reference(x):
    B, d, h, w, num_cap, num_atom = x.shape
    return jnp.transpose(
        x.reshape(B, d * h * w, num_cap * num_atom), (0, 2, 1)
    ).reshape(B, num_cap * num_atom, d, h, w)


if __name__ == "__main__":
    key = jax.random.PRNGKey(0)
    k1, k2 = jax.random.split(key)

    # Case 1: tiny capsule (S=64, C=32, ~16 KB) -> single-step path.
    B, d, h, w, num_cap, num_atom = 2, 4, 4, 4, 4, 8
    x_small = jax.random.normal(
        k1, (B, d, h, w, num_cap, num_atom), dtype=jnp.float32)
    out_small = jax.block_until_ready(flat_cap(x_small))
    assert out_small.shape == (B, num_cap * num_atom, d, h, w)
    assert out_small.dtype == x_small.dtype
    assert jnp.array_equal(out_small, _reference(x_small))

    # Case 2: larger capsule (S=2048, C=64, 1 MiB) -> tiled path with
    # lane-dense tS=1024 output tiles, C untiled, grid (2, 2, 1).
    B, d, h, w, num_cap, num_atom = 2, 8, 16, 16, 4, 16
    x_big = jax.random.normal(
        k2, (B, d, h, w, num_cap, num_atom), dtype=jnp.float32)
    out_big = jax.block_until_ready(flat_cap(x_big))
    assert out_big.shape == (B, num_cap * num_atom, d, h, w)
    assert out_big.dtype == x_big.dtype
    assert jnp.array_equal(out_big, _reference(x_big))

    print("KERNEL_OK")
</pallas_src>

<mosaic_0001>
module attributes {stable_mosaic.version = 11 : i64} {
  func.func @_flatcap_kernel(%arg0: i32, %arg1: memref<2x64x32xf32, #tpu.memory_space<vmem>>, %arg2: memref<2x32x64xf32, #tpu.memory_space<vmem>>) attributes {dimension_semantics = [#tpu.dimension_semantics<arbitrary>], iteration_bounds = array<i64: 1>, scalar_prefetch = 0 : i64, scratch_operands = 0 : i64, tpu.core_type = #tpu.core_type<tc>, window_params = [{pipeline_mode = #tpu.pipeline_mode<synchronous>, transform_indices = @transform_0, window_bounds = array<i64: 2, 64, 32>}, {pipeline_mode = #tpu.pipeline_mode<synchronous>, transform_indices = @transform_1, window_bounds = array<i64: 2, 32, 64>}]} {
    %c0 = arith.constant 0 : index
    %c0_0 = arith.constant 0 : index
    %c0_1 = arith.constant 0 : index
    %0 = vector.load %arg1[%c0, %c0_0, %c0_1] : memref<2x64x32xf32, #tpu.memory_space<vmem>>, vector<2x64x32xf32>
    %1 = tpu.transpose %0, [0, 2, 1] : vector<2x64x32xf32> -> vector<2x32x64xf32>
    %c0_2 = arith.constant 0 : index
    %c0_3 = arith.constant 0 : index
    %c0_4 = arith.constant 0 : index
    %2 = vector.load %arg2[%c0_2, %c0_3, %c0_4] : memref<2x32x64xf32, #tpu.memory_space<vmem>>, vector<2x32x64xf32>
    tpu.vector_store %arg2[%c0_2, %c0_3, %c0_4], %1 {strides = array<i32>} : memref<2x32x64xf32, #tpu.memory_space<vmem>>, vector<2x32x64xf32>,
    return
  }
  func.func @transform_0(%arg0: i32) -> (i32, i32, i32) {
    %c0_i32 = arith.constant 0 : i32
    %c0_i32_0 = arith.constant 0 : i32
    %c0_i32_1 = arith.constant 0 : i32
    %c0_i32_2 = arith.constant 0 : i32
    return %c0_i32, %c0_i32_0, %c0_i32_1 : i32, i32, i32
  }
  func.func @transform_1(%arg0: i32) -> (i32, i32, i32) {
    %c0_i32 = arith.constant 0 : i32
    %c0_i32_0 = arith.constant 0 : i32
    %c0_i32_1 = arith.constant 0 : i32
    %c0_i32_2 = arith.constant 0 : i32
    return %c0_i32, %c0_i32_0, %c0_i32_1 : i32, i32, i32
  }
}

</mosaic_0001>

<llo_original>
// kernel: tpu_custom_call.1
$region0: #{tpu_custom_call.1}
  #allocation0 [shape = 'u32[]', space=smem, size = 0x4, offset = 0x4, fixed_abs, tag = 'smem constant byte address 0x4 - core index']
  #allocation1 [shape = 'u32[144,128]{1,0:T(1,128)}', space=vmem, size = 0x12000, scoped, tag = 'internal scratch']
  %s0 = inlined_call_operand.vmem [shape: f32[2,64,32], index: 0, kind: input, shape index: {}]
  %s1 = inlined_call_operand.hbm [shape: f32[2,32,64], index: 1, kind: output, shape index: {}]
  %s2 = sld [smem:[#allocation0]]
  $region14: #{tpu_custom_call.1} parent=0
    _
  %s4 = ssub.s32 1, %s2
  %s5 = scalar_select 0, %s4, %s2
  $region1: #{tpu_custom_call.1} parent=0
    #allocation2 [shape = 'u8[32768]{0}', space=vmem, size = 0x8000, scoped, tag = 'output window, operand 0, single buffered']
    #allocation3 [shape = 's32[1]{0}', space=sflag, size = 0x4, scoped, tag = 'scoped memory for tpu_custom_call.1']
    %6 = vsyncpa [#allocation3], 0
    // Predicated region
    $region2: #{tpu_custom_call.1} parent=1 // pred_check
      _
    $region3: #{tpu_custom_call.1} parent=1 // pred_check_branch
      %8 = sbr.rel (0) target = $region5
    $region4: #{tpu_custom_call.1} parent=1 // pred_region
      _
    $region5: #{tpu_custom_call.1} parent=1 // pred_fallthru
      _
    %v9 = vld [vmem:[%s0] sm:$0xff]
    %v10 = vld [vmem:[%s0 + $0x8] sm:$0xff]
    %v11 = vld [vmem:[%s0 + $0x10] sm:$0xff]
    %v12 = vld [vmem:[%s0 + $0x18] sm:$0xff]
    %v13 = vld [vmem:[%s0 + $0x20] sm:$0xff]
    %v14 = vld [vmem:[%s0 + $0x28] sm:$0xff]
    %v15 = vld [vmem:[%s0 + $0x30] sm:$0xff]
    %v16 = vld [vmem:[%s0 + $0x38] sm:$0xff]
    %v17 = vld [vmem:[%s0 + $0x40] sm:$0xff]
    %v18 = vld [vmem:[%s0 + $0x48] sm:$0xff]
    %v19 = vld [vmem:[%s0 + $0x50] sm:$0xff]
    %v20 = vld [vmem:[%s0 + $0x58] sm:$0xff]
    %v21 = vld [vmem:[%s0 + $0x60] sm:$0xff]
    %v22 = vld [vmem:[%s0 + $0x68] sm:$0xff]
    %v23 = vld [vmem:[%s0 + $0x70] sm:$0xff]
    %v24 = vld [vmem:[%s0 + $0x78] sm:$0xff]
    %25 = vxpose.xlu0.b32.start [1/16] %v9, 128
    %26 = vxpose.xlu0.b32.cont [2/16] %v10, 128
    %27 = vxpose.xlu0.b32.cont [3/16] %v11, 128
    %28 = vxpose.xlu0.b32.cont [4/16] %v12, 128
    %29 = vxpose.xlu0.b32.cont [5/16] %v13, 128
    %30 = vxpose.xlu0.b32.cont [6/16] %v14, 128
    %31 = vxpose.xlu0.b32.cont [7/16] %v15, 128
    %32 = vxpose.xlu0.b32.cont [8/16] %v16, 128
    %33 = vxpose.xlu0.b32.cont [9/16] 0.0, 128
    %34 = vxpose.xlu0.b32.cont [10/16] 0.0, 128
    %35 = vxpose.xlu0.b32.cont [11/16] 0.0, 128
    %36 = vxpose.xlu0.b32.cont [12/16] 0.0, 128
    %37 = vxpose.xlu0.b32.cont [13/16] 0.0, 128
    %38 = vxpose.xlu0.b32.cont [14/16] 0.0, 128
    %39 = vxpose.xlu0.b32.cont [15/16] 0.0, 128
    %40 = vxpose.xlu0.b32.end [16/16] 0.0, 128
    %v41 = vpop.trf.xlu0
    %v42 = vpop.trf.xlu0
    %v43 = vpop.trf.xlu0
    %v44 = vpop.trf.xlu0
    %v45 = vpop.trf.xlu0
    %v46 = vpop.trf.xlu0
    %v47 = vpop.trf.xlu0
    %v48 = vpop.trf.xlu0
    %v49 = vpop.trf.xlu0
    %v50 = vpop.trf.xlu0
    %v51 = vpop.trf.xlu0
    %v52 = vpop.trf.xlu0
    %v53 = vpop.trf.xlu0
    %v54 = vpop.trf.xlu0
    %v55 = vpop.trf.xlu0
    %v56 = vpop.trf.xlu0
    %57 = vxpose.xlu0.b32.start [1/16] %v17, 128
    %58 = vxpose.xlu0.b32.cont [2/16] %v18, 128
    %59 = vxpose.xlu0.b32.cont [3/16] %v19, 128
    %60 = vxpose.xlu0.b32.cont [4/16] %v20, 128
    %61 = vxpose.xlu0.b32.cont [5/16] %v21, 128
    %62 = vxpose.xlu0.b32.cont [6/16] %v22, 128
    %63 = vxpose.xlu0.b32.cont [7/16] %v23, 128
    %64 = vxpose.xlu0.b32.cont [8/16] %v24, 128
    %65 = vxpose.xlu0.b32.cont [9/16] 0.0, 128
    %66 = vxpose.xlu0.b32.cont [10/16] 0.0, 128
    %67 = vxpose.xlu0.b32.cont [11/16] 0.0, 128
    %68 = vxpose.xlu0.b32.cont [12/16] 0.0, 128
    %69 = vxpose.xlu0.b32.cont [13/16] 0.0, 128
    %70 = vxpose.xlu0.b32.cont [14/16] 0.0, 128
    %71 = vxpose.xlu0.b32.cont [15/16] 0.0, 128
    %72 = vxpose.xlu0.b32.end [16/16] 0.0, 128
    %v73 = vpop.trf.xlu0
    %v74 = vpop.trf.xlu0
    %v75 = vpop.trf.xlu0
    %v76 = vpop.trf.xlu0
    %v77 = vpop.trf.xlu0
    %v78 = vpop.trf.xlu0
    %v79 = vpop.trf.xlu0
    %v80 = vpop.trf.xlu0
    %v81 = vpop.trf.xlu0
    %v82 = vpop.trf.xlu0
    %v83 = vpop.trf.xlu0
    %v84 = vpop.trf.xlu0
    %v85 = vpop.trf.xlu0
    %v86 = vpop.trf.xlu0
    %v87 = vpop.trf.xlu0
    %v88 = vpop.trf.xlu0
    %vm89 = vcmask 523264
    %90 = vst.msk [vmem:[#allocation2] sm:$0xff] %vm89, %v41
    %91 = vst.msk [vmem:[#allocation2 + $0x8] sm:$0xff] %vm89, %v42
    %92 = vst.msk [vmem:[#allocation2 + $0x10] sm:$0xff] %vm89, %v43
    %93 = vst.msk [vmem:[#allocation2 + $0x18] sm:$0xff] %vm89, %v44
    %94 = vst.msk [vmem:[#allocation2 + $0x20] sm:$0xff] %vm89, %v73
    %95 = vst.msk [vmem:[#allocation2 + $0x28] sm:$0xff] %vm89, %v74
    %96 = vst.msk [vmem:[#allocation2 + $0x30] sm:$0xff] %vm89, %v75
    %97 = vst.msk [vmem:[#allocation2 + $0x38] sm:$0xff] %vm89, %v76
    // Predicated region
    $region6: #{tpu_custom_call.1} parent=1 // pred_check
      _
    $region7: #{tpu_custom_call.1} parent=1 // pred_check_branch
      %99 = sbr.rel (0) target = $region9
    $region8: #{tpu_custom_call.1} parent=1 // pred_region
      %s101 = ssub.s32 1024, 1024
      %102 = vsyncadd [#allocation3], %s101
      %s103 = sshll.u32 [#allocation2], 4
      %s104 = int_to_ptr.vmem [resolvable:$true] %s103
      %109 = dma.vmem_to_hbm [thread:$0]  %s104, 1024, %s1, [#allocation3], 128, 128, 8
    $region9: #{tpu_custom_call.1} parent=1 // pred_fallthru
      _
    // Predicated region
    $region10: #{tpu_custom_call.1} parent=1 // pred_check
      _
    $region11: #{tpu_custom_call.1} parent=1 // pred_check_branch
      %111 = sbr.rel (0) target = $region13
    $region12: #{tpu_custom_call.1} parent=1 // pred_region
      %112 = dma.done [#allocation3], 1024
    $region13: #{tpu_custom_call.1} parent=1 // pred_fallthru
      _
    %113 = vsyncpa [#allocation3], 1

</llo_original>
